<compile_context>
chip_gen: v7x
topology: tpu7x:2x2x1
jax: 0.10.0
libtpu: 0.0.40
codegen_flags: <defaults>
</compile_context>

<pallas_src>
import functools

import jax
import jax.numpy as jnp
import numpy as np
from jax import lax
from jax.experimental import pallas as pl
from jax.experimental.pallas import tpu as pltpu


def _mha_kernel(x_ref, wqkv_ref, pw_ref, pb_ref, o_ref,
                *, n_heads, head_size, n_embd, seq_len):
    """One grid step == one batch element.

    x_ref    : (1, T, C)        VMEM f32
    wqkv_ref : (C, 3*C)         VMEM bf16  fused [Wq | Wk | Wv], head-major lanes
    pw_ref   : (n_heads, H, C)  VMEM bf16  output projection, split per head
    pb_ref   : (1, C)           VMEM f32   output projection bias
    o_ref    : (1, T, C)        VMEM f32
    """
    T, C, H, NH = seq_len, n_embd, head_size, n_heads

    x = x_ref[0].astype(jnp.bfloat16)                           # (T, C)

    # --- fused QKV projection: one wide MXU matmul, f32 accumulation --------
    qkv = jnp.dot(x, wqkv_ref[...], preferred_element_type=jnp.float32)  # (T, 3C)

    # NOTE: the PyTorch module scales by C**-0.5 (n_embd), not head_size**-0.5.
    # Fold the scale into q (T*C elems) instead of the (T,T) score matrices.
    scale = 1.0 / float(C) ** 0.5
    q = qkv[:, 0 * C:1 * C] * scale
    k = qkv[:, 1 * C:2 * C]
    v = qkv[:, 2 * C:3 * C]

    # Re-lay the per-head lane slices into a leading heads axis so scores and
    # PV run as batched MXU einsums and the softmax works on one (NH,T,T) slab.
    def split_heads(a):                                          # (T,C) -> (NH,T,H)
        return jnp.stack([a[:, h * H:(h + 1) * H] for h in range(NH)], axis=0)

    q3 = split_heads(q).astype(jnp.bfloat16)
    k3 = split_heads(k).astype(jnp.bfloat16)
    v3 = split_heads(v).astype(jnp.bfloat16)

    # --- scaled causal attention, batched over heads -------------------------
    s = jnp.einsum('htd,hsd->hts', q3, k3,
                   preferred_element_type=jnp.float32)           # (NH, T, T) f32

    row = lax.broadcasted_iota(jnp.int32, (T, T), 0)
    col = lax.broadcasted_iota(jnp.int32, (T, T), 1)
    causal = (col <= row)[None]                                  # (1, T, T)
    s = jnp.where(causal, s, -1e30)     # large finite negative -> NaN-safe mask

    # Numerically stable softmax in f32; divide goes to the EUP slot.
    m = jnp.max(s, axis=-1, keepdims=True)
    p = jnp.exp(s - m)
    denom = jnp.sum(p, axis=-1, keepdims=True)
    p = p * pl.reciprocal(denom, approx=True)
    # TODO(synk): attention-weight dropout is a no-op here (inference semantics);
    #             training mode would need pltpu.prng_seed / prng_random_bits.

    o = jnp.einsum('hts,hsd->htd', p.astype(jnp.bfloat16), v3,
                   preferred_element_type=jnp.float32)           # (NH, T, H) f32

    # --- head-concat fused into the output projection ------------------------
    # y = sum_h o_h @ Wp[h]; each partial is a lane-dense (T, C) MXU output,
    # so no lane-axis concatenate/relayout is needed.
    y = jnp.zeros((T, C), jnp.float32)
    for h in range(NH):                                          # static unroll, NH small
        y = y + jnp.dot(o[h].astype(jnp.bfloat16), pw_ref[h],
                        preferred_element_type=jnp.float32)
    y = y + pb_ref[0]
    # TODO(synk): output dropout is likewise identity (eval mode).
    # NOTE: C=32 < 128 lanes -> masked vst; at production size keep C % 128 == 0.
    o_ref[0] = y.astype(o_ref.dtype)


def multi_head_attention(x, wq, wk, wv, proj_w_t, proj_b, *, n_heads):
    """x: (B,T,C); wq/wk/wv: (n_heads,C,H); proj_w_t: (C,C); proj_b: (1,C)."""
    B, T, C = x.shape
    H = wq.shape[-1]
    assert n_heads * H == C, "projection requires n_heads * head_size == n_embd"

    # Layout plumbing (wrapper side): fuse Q/K/V weights into one (C, 3C)
    # matrix (head-major along lanes) and split the projection weight per head.
    # Weights are pre-cast to bf16 (MXU-native on v5e/v6e/v7x); accumulation
    # inside the kernel stays f32.
    def to_2d(w):                                                # (NH,C,H) -> (C, NH*H)
        return jnp.transpose(w, (1, 0, 2)).reshape(C, n_heads * H)

    wqkv = jnp.concatenate([to_2d(wq), to_2d(wk), to_2d(wv)],
                           axis=1).astype(jnp.bfloat16)          # (C, 3C)
    pw3 = proj_w_t.reshape(n_heads, H, C).astype(jnp.bfloat16)   # (NH, H, C)

    kernel = functools.partial(_mha_kernel, n_heads=n_heads, head_size=H,
                               n_embd=C, seq_len=T)

    # Grid = batch, marked "parallel": dual-TC v7x shards it across both cores.
    # On single-TC v5e/v6e this is a short serial loop; collapsing it to one
    # step would save (B-1)*~0.35us of pipeline overhead but idle a v7x core.
    # NOTE(v7x): the grid-invariant weight operands are double-buffered by
    # default; at production C single-buffer them (pipeline_mode=pl.Buffered(1))
    # or raise vmem_limit_bytes — negligible at C=32 so left default here.
    # TODO(synk): at production T (>=2K) replace the materialized (T,T) scores
    #             with a KV-tiled online-softmax (flash) accumulator.
    return pl.pallas_call(
        kernel,
        out_shape=jax.ShapeDtypeStruct((B, T, C), x.dtype),
        grid_spec=pltpu.PrefetchScalarGridSpec(
            num_scalar_prefetch=0,
            grid=(B,),
            in_specs=[
                pl.BlockSpec((1, T, C), lambda b: (b, 0, 0)),        # x
                pl.BlockSpec((C, 3 * C), lambda b: (0, 0)),          # fused QKV weight
                pl.BlockSpec((n_heads, H, C), lambda b: (0, 0, 0)),  # proj weight (per head)
                pl.BlockSpec((1, C), lambda b: (0, 0)),              # proj bias
            ],
            out_specs=pl.BlockSpec((1, T, C), lambda b: (b, 0, 0)),
        ),
        compiler_params=pltpu.CompilerParams(
            dimension_semantics=("parallel",)),
    )(x, wqkv, pw3, proj_b)


def _reference(x, wq, wk, wv, proj_w_t, proj_b, *, n_heads):
    """Pure-JAX f32 reference replicating the PyTorch forward (eval mode)."""
    B, T, C = x.shape
    scale = 1.0 / float(C) ** 0.5
    mask = jnp.tril(jnp.ones((T, T), dtype=bool))
    outs = []
    for h in range(n_heads):
        q = x @ wq[h]
        k = x @ wk[h]
        v = x @ wv[h]
        s = jnp.einsum("btd,bsd->bts", q, k) * scale
        s = jnp.where(mask[None], s, -jnp.inf)
        p = jax.nn.softmax(s, axis=-1)
        outs.append(jnp.einsum("bts,bsd->btd", p, v))
    cat = jnp.concatenate(outs, axis=-1)
    return cat @ proj_w_t + proj_b[0]


if __name__ == "__main__":
    # Module hyperparameters (n_heads * head_size == n_embd, as the projection requires)
    n_heads, head_size, block_size, n_embd = 4, 8, 8, 32
    B, T, C = 2, block_size, n_embd

    key = jax.random.PRNGKey(0)
    kx, kq, kk, kv, kpw, kpb = jax.random.split(key, 6)

    x = jax.random.normal(kx, (B, T, C), dtype=jnp.float32)

    # Deterministic parameter init (already transposed for x @ W convention).
    w_scale = 1.0 / np.sqrt(C)
    wq = jax.random.uniform(kq, (n_heads, C, head_size), jnp.float32, -w_scale, w_scale)
    wk = jax.random.uniform(kk, (n_heads, C, head_size), jnp.float32, -w_scale, w_scale)
    wv = jax.random.uniform(kv, (n_heads, C, head_size), jnp.float32, -w_scale, w_scale)
    proj_w_t = jax.random.uniform(kpw, (C, C), jnp.float32, -w_scale, w_scale)
    proj_b = jax.random.uniform(kpb, (1, C), jnp.float32, -w_scale, w_scale)

    out = multi_head_attention(x, wq, wk, wv, proj_w_t, proj_b, n_heads=n_heads)
    out = jax.block_until_ready(out)

    ref = _reference(x, wq, wk, wv, proj_w_t, proj_b, n_heads=n_heads)
    # bf16 MXU operands (f32 accumulation) vs pure-f32 reference -> relaxed tolerance.
    np.testing.assert_allclose(np.asarray(out), np.asarray(ref), atol=2e-2, rtol=2e-2)

    print("KERNEL_OK")
</pallas_src>

<mosaic_0001>
module attributes {stable_mosaic.version = 11 : i64} {
  func.func @_mha_kernel(%arg0: i32, %arg1: memref<1x8x32xf32, #tpu.memory_space<vmem>>, %arg2: memref<32x96xbf16, #tpu.memory_space<vmem>>, %arg3: memref<4x8x32xbf16, #tpu.memory_space<vmem>>, %arg4: memref<1x32xf32, #tpu.memory_space<vmem>>, %arg5: memref<1x8x32xf32, #tpu.memory_space<vmem>>) attributes {dimension_semantics = [#tpu.dimension_semantics<parallel>], iteration_bounds = array<i64: 2>, scalar_prefetch = 0 : i64, scratch_operands = 0 : i64, tpu.core_type = #tpu.core_type<tc>, window_params = [{transform_indices = @transform_0, window_bounds = array<i64: 1, 8, 32>}, {pipeline_mode = #tpu.pipeline_mode<synchronous>, transform_indices = @transform_1, window_bounds = array<i64: 32, 96>}, {pipeline_mode = #tpu.pipeline_mode<synchronous>, transform_indices = @transform_2, window_bounds = array<i64: 4, 8, 32>}, {pipeline_mode = #tpu.pipeline_mode<synchronous>, transform_indices = @transform_3, window_bounds = array<i64: 1, 32>}, {transform_indices = @transform_4, window_bounds = array<i64: 1, 8, 32>}]} {
    %c0 = arith.constant 0 : index
    %c0_0 = arith.constant 0 : index
    %c0_1 = arith.constant 0 : index
    %0 = vector.load %arg1[%c0, %c0_0, %c0_1] : memref<1x8x32xf32, #tpu.memory_space<vmem>>, vector<1x8x32xf32>
    %1 = vector.shape_cast %0 : vector<1x8x32xf32> to vector<8x32xf32>
    %2 = arith.truncf %1 : vector<8x32xf32> to vector<8x32xbf16>
    %c0_2 = arith.constant 0 : index
    %c0_3 = arith.constant 0 : index
    %3 = vector.load %arg2[%c0_2, %c0_3] : memref<32x96xbf16, #tpu.memory_space<vmem>>, vector<32x96xbf16>
    %cst = arith.constant dense<0.000000e+00> : vector<8x96xf32>
    %4 = tpu.matmul %2, %3, %cst {dimension_numbers = #tpu.dot_dimension_numbers<[1], [0], [0], [1], [0, 0, 1, 1], [], []>} : vector<8x32xbf16>, vector<32x96xbf16>, vector<8x96xf32> -> vector<8x96xf32>
    %5 = vector.extract_strided_slice %4 {offsets = [0, 0], sizes = [8, 32], strides = [1, 1]} : vector<8x96xf32> to vector<8x32xf32>
    %cst_4 = arith.constant 0.176776692 : f32
    %6 = vector.broadcast %cst_4 : f32 to vector<8x32xf32>
    %7 = arith.mulf %5, %6 : vector<8x32xf32>
    %8 = vector.extract_strided_slice %4 {offsets = [0, 32], sizes = [8, 32], strides = [1, 1]} : vector<8x96xf32> to vector<8x32xf32>
    %9 = vector.extract_strided_slice %4 {offsets = [0, 64], sizes = [8, 32], strides = [1, 1]} : vector<8x96xf32> to vector<8x32xf32>
    %10 = vector.extract_strided_slice %7 {offsets = [0, 0], sizes = [8, 8], strides = [1, 1]} : vector<8x32xf32> to vector<8x8xf32>
    %11 = vector.extract_strided_slice %7 {offsets = [0, 8], sizes = [8, 8], strides = [1, 1]} : vector<8x32xf32> to vector<8x8xf32>
    %12 = vector.extract_strided_slice %7 {offsets = [0, 16], sizes = [8, 8], strides = [1, 1]} : vector<8x32xf32> to vector<8x8xf32>
    %13 = vector.extract_strided_slice %7 {offsets = [0, 24], sizes = [8, 8], strides = [1, 1]} : vector<8x32xf32> to vector<8x8xf32>
    %14 = vector.shape_cast %10 : vector<8x8xf32> to vector<1x8x8xf32>
    %15 = vector.shape_cast %11 : vector<8x8xf32> to vector<1x8x8xf32>
    %16 = vector.shape_cast %12 : vector<8x8xf32> to vector<1x8x8xf32>
    %17 = vector.shape_cast %13 : vector<8x8xf32> to vector<1x8x8xf32>
    %18 = tpu.concatenate %14, %15, %16, %17 in 0 : vector<1x8x8xf32>, vector<1x8x8xf32>, vector<1x8x8xf32>, vector<1x8x8xf32> -> vector<4x8x8xf32>
    %19 = arith.truncf %18 : vector<4x8x8xf32> to vector<4x8x8xbf16>
    %20 = vector.extract_strided_slice %8 {offsets = [0, 0], sizes = [8, 8], strides = [1, 1]} : vector<8x32xf32> to vector<8x8xf32>
    %21 = vector.extract_strided_slice %8 {offsets = [0, 8], sizes = [8, 8], strides = [1, 1]} : vector<8x32xf32> to vector<8x8xf32>
    %22 = vector.extract_strided_slice %8 {offsets = [0, 16], sizes = [8, 8], strides = [1, 1]} : vector<8x32xf32> to vector<8x8xf32>
    %23 = vector.extract_strided_slice %8 {offsets = [0, 24], sizes = [8, 8], strides = [1, 1]} : vector<8x32xf32> to vector<8x8xf32>
    %24 = vector.shape_cast %20 : vector<8x8xf32> to vector<1x8x8xf32>
    %25 = vector.shape_cast %21 : vector<8x8xf32> to vector<1x8x8xf32>
    %26 = vector.shape_cast %22 : vector<8x8xf32> to vector<1x8x8xf32>
    %27 = vector.shape_cast %23 : vector<8x8xf32> to vector<1x8x8xf32>
    %28 = tpu.concatenate %24, %25, %26, %27 in 0 : vector<1x8x8xf32>, vector<1x8x8xf32>, vector<1x8x8xf32>, vector<1x8x8xf32> -> vector<4x8x8xf32>
    %29 = arith.truncf %28 : vector<4x8x8xf32> to vector<4x8x8xbf16>
    %30 = vector.extract_strided_slice %9 {offsets = [0, 0], sizes = [8, 8], strides = [1, 1]} : vector<8x32xf32> to vector<8x8xf32>
    %31 = vector.extract_strided_slice %9 {offsets = [0, 8], sizes = [8, 8], strides = [1, 1]} : vector<8x32xf32> to vector<8x8xf32>
    %32 = vector.extract_strided_slice %9 {offsets = [0, 16], sizes = [8, 8], strides = [1, 1]} : vector<8x32xf32> to vector<8x8xf32>
    %33 = vector.extract_strided_slice %9 {offsets = [0, 24], sizes = [8, 8], strides = [1, 1]} : vector<8x32xf32> to vector<8x8xf32>
    %34 = vector.shape_cast %30 : vector<8x8xf32> to vector<1x8x8xf32>
    %35 = vector.shape_cast %31 : vector<8x8xf32> to vector<1x8x8xf32>
    %36 = vector.shape_cast %32 : vector<8x8xf32> to vector<1x8x8xf32>
    %37 = vector.shape_cast %33 : vector<8x8xf32> to vector<1x8x8xf32>
    %38 = tpu.concatenate %34, %35, %36, %37 in 0 : vector<1x8x8xf32>, vector<1x8x8xf32>, vector<1x8x8xf32>, vector<1x8x8xf32> -> vector<4x8x8xf32>
    %39 = arith.truncf %38 : vector<4x8x8xf32> to vector<4x8x8xbf16>
    "tpu.trace_start"() <{level = 10 : i32, message = "htd,hsd->hts"}> : () -> ()
    %cst_5 = arith.constant dense<0.000000e+00> : vector<4x8x8xf32>
    %40 = tpu.matmul %19, %29, %cst_5 {dimension_numbers = #tpu.dot_dimension_numbers<[2], [2], [1], [1], [0, 0, 0, 1, 1, 1], [0], [0]>} : vector<4x8x8xbf16>, vector<4x8x8xbf16>, vector<4x8x8xf32> -> vector<4x8x8xf32>
    "tpu.trace_stop"() : () -> ()
    %41 = tpu.iota {dimensions = array<i32: 0>} : vector<8x8xi32>
    %42 = tpu.iota {dimensions = array<i32: 1>} : vector<8x8xi32>
    %43 = arith.cmpi sle, %42, %41 : vector<8x8xi32>
    %44 = vector.shape_cast %43 : vector<8x8xi1> to vector<1x8x8xi1>
    %cst_6 = arith.constant -1.000000e+30 : f32
    %45 = vector.shape_cast %44 : vector<1x8x8xi1> to vector<1x8x8xi1>
    %46 = vector.broadcast %45 : vector<1x8x8xi1> to vector<4x8x8xi1>
    %47 = vector.broadcast %cst_6 : f32 to vector<4x8x8xf32>
    %48 = arith.select %46, %40, %47 : vector<4x8x8xi1>, vector<4x8x8xf32>
    %cst_7 = arith.constant dense<0xFF800000> : vector<4x8xf32>
    %49 = vector.multi_reduction <maximumf>, %48, %cst_7 [2] : vector<4x8x8xf32> to vector<4x8xf32>
    %50 = vector.shape_cast %49 : vector<4x8xf32> to vector<4x8x1xf32>
    %51 = vector.broadcast %50 : vector<4x8x1xf32> to vector<4x8x8xf32>
    %52 = arith.subf %48, %51 : vector<4x8x8xf32>
    %53 = math.exp %52 : vector<4x8x8xf32>
    %cst_8 = arith.constant dense<0.000000e+00> : vector<4x8xf32>
    %54 = vector.multi_reduction <add>, %53, %cst_8 [2] : vector<4x8x8xf32> to vector<4x8xf32>
    %55 = vector.shape_cast %54 : vector<4x8xf32> to vector<4x8x1xf32>
    %56 = tpu.reciprocal %55 {approx = true} : vector<4x8x1xf32> -> vector<4x8x1xf32>
    %57 = vector.broadcast %56 : vector<4x8x1xf32> to vector<4x8x8xf32>
    %58 = arith.mulf %53, %57 : vector<4x8x8xf32>
    %59 = arith.truncf %58 : vector<4x8x8xf32> to vector<4x8x8xbf16>
    "tpu.trace_start"() <{level = 10 : i32, message = "hts,hsd->htd"}> : () -> ()
    %cst_9 = arith.constant dense<0.000000e+00> : vector<4x8x8xf32>
    %60 = tpu.matmul %59, %39, %cst_9 {dimension_numbers = #tpu.dot_dimension_numbers<[2], [1], [1], [2], [0, 0, 0, 1, 1, 2], [0], [0]>} : vector<4x8x8xbf16>, vector<4x8x8xbf16>, vector<4x8x8xf32> -> vector<4x8x8xf32>
    %cst_10 = arith.constant 0.000000e+00 : f32
    "tpu.trace_stop"() : () -> ()
    %61 = vector.broadcast %cst_10 : f32 to vector<8x32xf32>
    %62 = vector.extract_strided_slice %60 {offsets = [0, 0, 0], sizes = [1, 8, 8], strides = [1, 1, 1]} : vector<4x8x8xf32> to vector<1x8x8xf32>
    %63 = vector.shape_cast %62 : vector<1x8x8xf32> to vector<8x8xf32>
    %64 = arith.truncf %63 : vector<8x8xf32> to vector<8x8xbf16>
    %c0_11 = arith.constant 0 : index
    %c0_12 = arith.constant 0 : index
    %c0_13 = arith.constant 0 : index
    %65 = vector.load %arg3[%c0_11, %c0_12, %c0_13] : memref<4x8x32xbf16, #tpu.memory_space<vmem>>, vector<1x8x32xbf16>
    %66 = vector.shape_cast %65 : vector<1x8x32xbf16> to vector<8x32xbf16>
    %cst_14 = arith.constant dense<0.000000e+00> : vector<8x32xf32>
    %67 = tpu.matmul %64, %66, %cst_14 {dimension_numbers = #tpu.dot_dimension_numbers<[1], [0], [0], [1], [0, 0, 1, 1], [], []>} : vector<8x8xbf16>, vector<8x32xbf16>, vector<8x32xf32> -> vector<8x32xf32>
    %68 = arith.addf %61, %67 : vector<8x32xf32>
    %69 = vector.extract_strided_slice %60 {offsets = [1, 0, 0], sizes = [1, 8, 8], strides = [1, 1, 1]} : vector<4x8x8xf32> to vector<1x8x8xf32>
    %70 = vector.shape_cast %69 : vector<1x8x8xf32> to vector<8x8xf32>
    %71 = arith.truncf %70 : vector<8x8xf32> to vector<8x8xbf16>
    %c1 = arith.constant 1 : index
    %c0_15 = arith.constant 0 : index
    %c0_16 = arith.constant 0 : index
    %72 = vector.load %arg3[%c1, %c0_15, %c0_16] : memref<4x8x32xbf16, #tpu.memory_space<vmem>>, vector<1x8x32xbf16>
    %73 = vector.shape_cast %72 : vector<1x8x32xbf16> to vector<8x32xbf16>
    %cst_17 = arith.constant dense<0.000000e+00> : vector<8x32xf32>
    %74 = tpu.matmul %71, %73, %cst_17 {dimension_numbers = #tpu.dot_dimension_numbers<[1], [0], [0], [1], [0, 0, 1, 1], [], []>} : vector<8x8xbf16>, vector<8x32xbf16>, vector<8x32xf32> -> vector<8x32xf32>
    %75 = arith.addf %68, %74 : vector<8x32xf32>
    %76 = vector.extract_strided_slice %60 {offsets = [2, 0, 0], sizes = [1, 8, 8], strides = [1, 1, 1]} : vector<4x8x8xf32> to vector<1x8x8xf32>
    %77 = vector.shape_cast %76 : vector<1x8x8xf32> to vector<8x8xf32>
    %78 = arith.truncf %77 : vector<8x8xf32> to vector<8x8xbf16>
    %c2 = arith.constant 2 : index
    %c0_18 = arith.constant 0 : index
    %c0_19 = arith.constant 0 : index
    %79 = vector.load %arg3[%c2, %c0_18, %c0_19] : memref<4x8x32xbf16, #tpu.memory_space<vmem>>, vector<1x8x32xbf16>
    %80 = vector.shape_cast %79 : vector<1x8x32xbf16> to vector<8x32xbf16>
    %cst_20 = arith.constant dense<0.000000e+00> : vector<8x32xf32>
    %81 = tpu.matmul %78, %80, %cst_20 {dimension_numbers = #tpu.dot_dimension_numbers<[1], [0], [0], [1], [0, 0, 1, 1], [], []>} : vector<8x8xbf16>, vector<8x32xbf16>, vector<8x32xf32> -> vector<8x32xf32>
    %82 = arith.addf %75, %81 : vector<8x32xf32>
    %83 = vector.extract_strided_slice %60 {offsets = [3, 0, 0], sizes = [1, 8, 8], strides = [1, 1, 1]} : vector<4x8x8xf32> to vector<1x8x8xf32>
    %84 = vector.shape_cast %83 : vector<1x8x8xf32> to vector<8x8xf32>
    %85 = arith.truncf %84 : vector<8x8xf32> to vector<8x8xbf16>
    %c3 = arith.constant 3 : index
    %c0_21 = arith.constant 0 : index
    %c0_22 = arith.constant 0 : index
    %86 = vector.load %arg3[%c3, %c0_21, %c0_22] : memref<4x8x32xbf16, #tpu.memory_space<vmem>>, vector<1x8x32xbf16>
    %87 = vector.shape_cast %86 : vector<1x8x32xbf16> to vector<8x32xbf16>
    %cst_23 = arith.constant dense<0.000000e+00> : vector<8x32xf32>
    %88 = tpu.matmul %85, %87, %cst_23 {dimension_numbers = #tpu.dot_dimension_numbers<[1], [0], [0], [1], [0, 0, 1, 1], [], []>} : vector<8x8xbf16>, vector<8x32xbf16>, vector<8x32xf32> -> vector<8x32xf32>
    %89 = arith.addf %82, %88 : vector<8x32xf32>
    %c0_24 = arith.constant 0 : index
    %c0_25 = arith.constant 0 : index
    %90 = vector.load %arg4[%c0_24, %c0_25] : memref<1x32xf32, #tpu.memory_space<vmem>>, vector<1x32xf32>
    %91 = vector.shape_cast %90 : vector<1x32xf32> to vector<32xf32>
    %92 = vector.shape_cast %91 : vector<32xf32> to vector<1x32xf32>
    %93 = vector.broadcast %92 : vector<1x32xf32> to vector<8x32xf32>
    %94 = arith.addf %89, %93 : vector<8x32xf32>
    %c0_26 = arith.constant 0 : index
    %c0_27 = arith.constant 0 : index
    %c0_28 = arith.constant 0 : index
    %95 = vector.load %arg5[%c0_26, %c0_27, %c0_28] : memref<1x8x32xf32, #tpu.memory_space<vmem>>, vector<1x8x32xf32>
    %96 = vector.shape_cast %95 : vector<1x8x32xf32> to vector<8x32xf32>
    %97 = vector.shape_cast %94 : vector<8x32xf32> to vector<1x8x32xf32>
    tpu.vector_store %arg5[%c0_26, %c0_27, %c0_28], %97 {strides = array<i32>} : memref<1x8x32xf32, #tpu.memory_space<vmem>>, vector<1x8x32xf32>,
    return
  }
  func.func @transform_0(%arg0: i32) -> (i32, i32, i32) {
    %c0_i32 = arith.constant 0 : i32
    %c0_i32_0 = arith.constant 0 : i32
    %c0_i32_1 = arith.constant 0 : i32
    return %arg0, %c0_i32, %c0_i32_0 : i32, i32, i32
  }
  func.func @transform_1(%arg0: i32) -> (i32, i32) {
    %c0_i32 = arith.constant 0 : i32
    %c0_i32_0 = arith.constant 0 : i32
    %c0_i32_1 = arith.constant 0 : i32
    return %c0_i32, %c0_i32_0 : i32, i32
  }
  func.func @transform_2(%arg0: i32) -> (i32, i32, i32) {
    %c0_i32 = arith.constant 0 : i32
    %c0_i32_0 = arith.constant 0 : i32
    %c0_i32_1 = arith.constant 0 : i32
    %c0_i32_2 = arith.constant 0 : i32
    return %c0_i32, %c0_i32_0, %c0_i32_1 : i32, i32, i32
  }
  func.func @transform_3(%arg0: i32) -> (i32, i32) {
    %c0_i32 = arith.constant 0 : i32
    %c0_i32_0 = arith.constant 0 : i32
    %c0_i32_1 = arith.constant 0 : i32
    return %c0_i32, %c0_i32_0 : i32, i32
  }
  func.func @transform_4(%arg0: i32) -> (i32, i32, i32) {
    %c0_i32 = arith.constant 0 : i32
    %c0_i32_0 = arith.constant 0 : i32
    %c0_i32_1 = arith.constant 0 : i32
    return %arg0, %c0_i32, %c0_i32_0 : i32, i32, i32
  }
}

</mosaic_0001>

<llo_original>
// kernel: tpu_custom_call.1
$region0: #{tpu_custom_call.1}
  #allocation0 [shape = 'u32[]', space=smem, size = 0x4, offset = 0x4, fixed_abs, tag = 'smem constant byte address 0x4 - core index']
  #allocation1 [shape = 'u32[144,128]{1,0:T(1,128)}', space=vmem, size = 0x12000, scoped, tag = 'internal scratch']
  %s0 = inlined_call_operand.hbm [shape: f32[2,8,32], index: 0, kind: input, shape index: {}]
  %s1 = inlined_call_operand.hbm [shape: bf16[32,96], index: 1, kind: input, shape index: {}]
  %s2 = inlined_call_operand.hbm [shape: bf16[4,8,32], index: 2, kind: input, shape index: {}]
  %s3 = inlined_call_operand.vmem [shape: f32[1,32], index: 3, kind: input, shape index: {}]
  %s4 = inlined_call_operand.hbm [shape: f32[2,8,32], index: 4, kind: output, shape index: {}]
  %s5 = sld [smem:[#allocation0]]
  $region61: #{tpu_custom_call.1} parent=0
    _
  %s7 = ssub.s32 1, %s5
  %s8 = scalar_select 0, %s7, %s5
  $region1: #{tpu_custom_call.1} parent=0
    #allocation2 [shape = 'u8[8192]{0}', space=vmem, size = 0x2000, scoped, tag = 'input window, operand 0']
    #allocation3 [shape = 's32[2]{0}', space=sflag, size = 0x8, scoped, tag = 'scoped memory for tpu_custom_call.1']
    #allocation4 [shape = 's32[2]{0}', space=sflag, size = 0x8, scoped, tag = 'scoped memory for tpu_custom_call.1']
    #allocation5 [shape = 'u8[8192]{0}', space=vmem, size = 0x2000, scoped, tag = 'input window, operand 1, single buffered']
    #allocation6 [shape = 's32[1]{0}', space=sflag, size = 0x4, scoped, tag = 'scoped memory for tpu_custom_call.1']
    #allocation7 [shape = 'u8[8192]{0}', space=vmem, size = 0x2000, scoped, tag = 'input window, operand 2, single buffered']
    #allocation8 [shape = 'u8[8192]{0}', space=vmem, size = 0x2000, scoped, tag = 'output window, operand 0']
    %9 = vsyncpa [#allocation3], 0
    %s10 = scalar_lea.sflag [#allocation3], 1
    %11 = vsyncpa %s10, 0
    %12 = vsyncpa [#allocation6], 0
    %13 = vsyncpa [#allocation4], 0
    %s14 = scalar_lea.sflag [#allocation4], 1
    %15 = vsyncpa %s14, 0
    loop: start=0, step=1, limit=4
    $region2: #{tpu_custom_call.1} parent=1 // loop_pre_header
      _
    $region3: #{tpu_custom_call.1} parent=1 // loop_header
      %s17 = sphi 0, %s21
      %p18 = scmp.ge.s32.totalorder %s17, 4
      %s27 = sphi 0, %s29
      %s30 = sphi 0, %s27
      %s31 = sphi 0, %s30
      %s47 = sphi 0, %s31
      %s51 = sphi 0, %s51
      %s53 = sphi 0, %s51
      %s54 = sphi 0, %s53
      %s68 = sphi 0, %s54
      %s72 = sphi 0, %s72
      %s74 = sphi 0, %s72
      %s75 = sphi 0, %s74
      %s89 = sphi 0, %s75
      %s93 = sphi 0, %s93
      %s95 = sphi 0, %s93
      %s96 = sphi 0, %s95
      %s110 = sphi 0, %s96
      %s116 = sphi 0, %s118
      %s119 = sphi 0, %s116
      %s120 = sphi 0, %s119
      %s136 = sphi 0, %s120
    $region4: #{tpu_custom_call.1} parent=1 // loop_header_branch
      %20 = sbr.rel (%p18) target = $region8
    $region5: #{tpu_custom_call.1} parent=1 // loop_body
      %s22 = ssub.s32 %s17, 1
      %s23 = ssub.s32 %s17, 2
      %s24 = sadd.s32 %s17, 1
      %s25 = ssub.s32 %s17, %s24
      %p26 = scmp.eq.s32.totalorder %s25, 0
      %s28 = sadd.s32 %s27, 1
      %s29 = scalar_select %p26, %s27, %s28
      %p32 = pneg %p26
      %p33 = scmp.eq.s32.totalorder %s17, 1
      %p34 = por %p32, %p33
      %p35 = scmp.ne.s32.totalorder %s27, %s30
      %p36 = scmp.eq.s32.totalorder %s17, 0
      %p37 = por %p35, %p36
      %p38 = scmp.ne.s32.totalorder %s27, %s30
      %p39 = scmp.eq.s32.totalorder %s22, 1
      %p40 = por %p38, %p39
      %p41 = scmp.ne.s32.totalorder %s30, %s31
      %p42 = scmp.eq.s32.totalorder %s22, 0
      %p43 = por %p41, %p42
      %p44 = scmp.ne.s32.totalorder %s30, %s31
      %p45 = scmp.eq.s32.totalorder %s23, 1
      %p46 = por %p44, %p45
      %p48 = scmp.ne.s32.totalorder %s31, %s47
      %p49 = scmp.eq.s32.totalorder %s23, 0
      %p50 = por %p48, %p49
      %s52 = sadd.s32 %s51, 1
      %p55 = scmp.eq.s32.totalorder %s17, 1
      %p56 = scmp.ne.s32.totalorder %s51, %s53
      %p57 = scmp.eq.s32.totalorder %s17, 0
      %p58 = por %p56, %p57
      %p59 = scmp.ne.s32.totalorder %s51, %s53
      %p60 = scmp.eq.s32.totalorder %s22, 1
      %p61 = por %p59, %p60
      %p62 = scmp.ne.s32.totalorder %s53, %s54
      %p63 = scmp.eq.s32.totalorder %s22, 0
      %p64 = por %p62, %p63
      %p65 = scmp.ne.s32.totalorder %s53, %s54
      %p66 = scmp.eq.s32.totalorder %s23, 1
      %p67 = por %p65, %p66
      %p69 = scmp.ne.s32.totalorder %s54, %s68
      %p70 = scmp.eq.s32.totalorder %s23, 0
      %p71 = por %p69, %p70
      %s73 = sadd.s32 %s72, 1
      %p76 = scmp.eq.s32.totalorder %s17, 1
      %p77 = scmp.ne.s32.totalorder %s72, %s74
      %p78 = scmp.eq.s32.totalorder %s17, 0
      %p79 = por %p77, %p78
      %p80 = scmp.ne.s32.totalorder %s72, %s74
      %p81 = scmp.eq.s32.totalorder %s22, 1
      %p82 = por %p80, %p81
      %p83 = scmp.ne.s32.totalorder %s74, %s75
      %p84 = scmp.eq.s32.totalorder %s22, 0
      %p85 = por %p83, %p84
      %p86 = scmp.ne.s32.totalorder %s74, %s75
      %p87 = scmp.eq.s32.totalorder %s23, 1
      %p88 = por %p86, %p87
      %p90 = scmp.ne.s32.totalorder %s75, %s89
      %p91 = scmp.eq.s32.totalorder %s23, 0
      %p92 = por %p90, %p91
      %s94 = sadd.s32 %s93, 1
      %p97 = scmp.eq.s32.totalorder %s17, 1
      %p98 = scmp.ne.s32.totalorder %s93, %s95
      %p99 = scmp.eq.s32.totalorder %s17, 0
      %p100 = por %p98, %p99
      %p101 = scmp.ne.s32.totalorder %s93, %s95
      %p102 = scmp.eq.s32.totalorder %s22, 1
      %p103 = por %p101, %p102
      %p104 = scmp.ne.s32.totalorder %s95, %s96
      %p105 = scmp.eq.s32.totalorder %s22, 0
      %p106 = por %p104, %p105
      %p107 = scmp.ne.s32.totalorder %s95, %s96
      %p108 = scmp.eq.s32.totalorder %s23, 1
      %p109 = por %p107, %p108
      %p111 = scmp.ne.s32.totalorder %s96, %s110
      %p112 = scmp.eq.s32.totalorder %s23, 0
      %p113 = por %p111, %p112
      %s114 = ssub.s32 %s17, %s24
      %p115 = scmp.eq.s32.totalorder %s114, 0
      %s117 = sadd.s32 %s116, 1
      %s118 = scalar_select %p115, %s116, %s117
      %p121 = pneg %p115
      %p122 = scmp.eq.s32.totalorder %s17, 1
      %p123 = por %p121, %p122
      %p124 = scmp.ne.s32.totalorder %s116, %s119
      %p125 = scmp.eq.s32.totalorder %s17, 0
      %p126 = por %p124, %p125
      %p127 = scmp.ne.s32.totalorder %s116, %s119
      %p128 = scmp.eq.s32.totalorder %s22, 1
      %p129 = por %p127, %p128
      %p130 = scmp.ne.s32.totalorder %s119, %s120
      %p131 = scmp.eq.s32.totalorder %s22, 0
      %p132 = por %p130, %p131
      %p133 = scmp.ne.s32.totalorder %s119, %s120
      %p134 = scmp.eq.s32.totalorder %s23, 1
      %p135 = por %p133, %p134
      %p137 = scmp.ne.s32.totalorder %s120, %s136
      %p138 = scmp.eq.s32.totalorder %s23, 0
      %p139 = por %p137, %p138
      %p140 = scmp.le.s32.totalorder 1, %s17
      %p141 = scmp.lt.s32.totalorder %s17, 3
      %p142 = pnand %p140, %p141
      %p143 = pneg %p142
      // Predicated region
      $region9: #{tpu_custom_call.1} parent=5 // pred_check
        _
      $region10: #{tpu_custom_call.1} parent=5 // pred_check_branch
        %145 = sbr.rel (%p142) target = $region12
      $region11: #{tpu_custom_call.1} parent=5 // pred_region
        %s146 = ssub.s32 %s17, 1
        // Predicated region
        $region13: #{tpu_custom_call.1} parent=11 // pred_check
          %p147 = pneg %p64
        $region14: #{tpu_custom_call.1} parent=11 // pred_check_branch
          %149 = sbr.rel (%p147) target = $region16
        $region15: #{tpu_custom_call.1} parent=11 // pred_region
          %s151 = ssub.s32 256, 256
          %152 = vsyncadd [#allocation6], %s151
          %s153 = sshll.u32 [#allocation5], 4
          %s154 = int_to_ptr.vmem [resolvable:$true] %s153
          %159 = dma.hbm_to_vmem [thread:$0]  %s1, 256, %s154, [#allocation6], 64, 64, 4
        $region16: #{tpu_custom_call.1} parent=11 // pred_fallthru
          _
        // Predicated region
        $region17: #{tpu_custom_call.1} parent=11 // pred_check
          %p160 = pneg %p85
        $region18: #{tpu_custom_call.1} parent=11 // pred_check_branch
          %162 = sbr.rel (%p160) target = $region20
        $region19: #{tpu_custom_call.1} parent=11 // pred_region
          %s164 = ssub.s32 256, 256
          %165 = vsyncadd [#allocation6], %s164
          %s166 = sshll.u32 [#allocation7], 4
          %s167 = int_to_ptr.vmem [resolvable:$true] %s166
          %172 = dma.hbm_to_vmem [thread:$0]  %s2, 256, %s167, [#allocation6], 64, 64, 4
        $region20: #{tpu_custom_call.1} parent=11 // pred_fallthru
          _
        // Predicated region
        $region21: #{tpu_custom_call.1} parent=11 // pred_check
          %p173 = pneg %p106
        $region22: #{tpu_custom_call.1} parent=11 // pred_check_branch
          %175 = sbr.rel (%p173) target = $region24
        $region23: #{tpu_custom_call.1} parent=11 // pred_region
          _
        $region24: #{tpu_custom_call.1} parent=11 // pred_fallthru
          _
      $region12: #{tpu_custom_call.1} parent=5 // pred_fallthru
        _
      %p176 = scmp.lt.s32.totalorder %s17, 2
      // Predicated region
      $region25: #{tpu_custom_call.1} parent=5 // pred_check
        %p177 = pneg %p176
      $region26: #{tpu_custom_call.1} parent=5 // pred_check_branch
        %179 = sbr.rel (%p177) target = $region28
      $region27: #{tpu_custom_call.1} parent=5 // pred_region
        // Predicated region
        $region29: #{tpu_custom_call.1} parent=27 // pred_check
          %p180 = pneg %p37
        $region30: #{tpu_custom_call.1} parent=27 // pred_check_branch
          %182 = sbr.rel (%p180) target = $region32
        $region31: #{tpu_custom_call.1} parent=27 // pred_region
          %s183 = sand.u32 %s27, 1
          %s184 = scalar_lea.sflag [#allocation3], %s183
          %s185 = sand.u32 %s27, 1
          %s186 = smul.addr %s185, 8
          %s187 = scalar_lea.vmem [#allocation2], %s186
          %s189 = ssub.s32 128, 128
          %190 = vsyncadd %s184, %s189
          %s191 = smul.addr %s17, 128
          %s192 = scalar_lea.hbm %s0, %s191
          %s194 = sshll.u32 %s187, 4
          %s195 = int_to_ptr.vmem [resolvable:$true] %s194
          %197 = dma.hbm_to_vmem [thread:$0]  %s192, 128, %s195, %s184
        $region32: #{tpu_custom_call.1} parent=27 // pred_fallthru
          _
      $region28: #{tpu_custom_call.1} parent=5 // pred_fallthru
        _
      %p198 = scmp.le.s32.totalorder 1, %s17
      %p199 = scmp.lt.s32.totalorder %s17, 3
      %p200 = pnand %p198, %p199
      %p201 = pneg %p200
      // Predicated region
      $region33: #{tpu_custom_call.1} parent=5 // pred_check
        _
      $region34: #{tpu_custom_call.1} parent=5 // pred_check_branch
        %203 = sbr.rel (%p200) target = $region36
      $region35: #{tpu_custom_call.1} parent=5 // pred_region
        %s204 = ssub.s32 %s17, 1
        %s205 = sand.u32 %s30, 1
        %s206 = scalar_lea.sflag [#allocation3], %s205
        %s207 = sand.u32 %s30, 1
        %s208 = smul.addr %s207, 8
        %s209 = scalar_lea.vmem [#allocation2], %s208
        // Predicated region
        $region37: #{tpu_custom_call.1} parent=35 // pred_check
          %p210 = pneg %p43
        $region38: #{tpu_custom_call.1} parent=35 // pred_check_branch
          %212 = sbr.rel (%p210) target = $region40
        $region39: #{tpu_custom_call.1} parent=35 // pred_region
          %213 = dma.done %s206, 128
        $region40: #{tpu_custom_call.1} parent=35 // pred_fallthru
          _
        // Predicated region
        $region41: #{tpu_custom_call.1} parent=35 // pred_check
          %p214 = pneg %p64
        $region42: #{tpu_custom_call.1} parent=35 // pred_check_branch
          %216 = sbr.rel (%p214) target = $region44
        $region43: #{tpu_custom_call.1} parent=35 // pred_region
          %217 = dma.done [#allocation6], 256
        $region44: #{tpu_custom_call.1} parent=35 // pred_fallthru
          _
        // Predicated region
        $region45: #{tpu_custom_call.1} parent=35 // pred_check
          %p218 = pneg %p85
        $region46: #{tpu_custom_call.1} parent=35 // pred_check_branch
          %220 = sbr.rel (%p218) target = $region48
        $region47: #{tpu_custom_call.1} parent=35 // pred_region
          %221 = dma.done [#allocation6], 256
        $region48: #{tpu_custom_call.1} parent=35 // pred_fallthru
          _
        %s222 = sand.u32 %s30, 1
        %s223 = scalar_lea.sflag [#allocation3], %s222
        %s224 = sand.u32 %s30, 1
        %s225 = smul.addr %s224, 8
        %s226 = scalar_lea.vmem [#allocation2], %s225
        %p227 = pneg %p43
        %p228 = pneg %p40
        %p229 = pneg %p64
        %p230 = pneg %p61
        %p231 = pneg %p85
        %p232 = pneg %p82
        %p233 = pneg %p106
        %p234 = pneg %p103
        %p235 = pneg %p132
        %p236 = pneg %p129
        %s237 = sand.u32 %s119, 1
        %s238 = scalar_lea.sflag [#allocation4], %s237
        %s239 = sand.u32 %s119, 1
        %s240 = smul.addr %s239, 8
        %s241 = scalar_lea.vmem [#allocation8], %s240
        %v243 = vld [vmem:[%s209] sm:$0xff]
        %v244 = vpack.c.bf16 %v243, %v243
        %v245 = vld [vmem:[#allocation5] sm:$0xf]
        %v246 = vld [vmem:[#allocation5 + $0x4] sm:$0xf]
        %v247 = vld [vmem:[#allocation5 + $0x8] sm:$0xf]
        %v248 = vld [vmem:[#allocation5 + $0xc] sm:$0xf]
        %v253 = vunpack.c.l.b16 %v245
        %v254 = vunpack.c.l.b16 %v246
        %v255 = vunpack.c.l.b16 %v247
        %v256 = vunpack.c.l.b16 %v248
        %v257 = vpack.c.b16 %v254, %v253
        %v258 = vpack.c.b16 %v256, %v255
        %vm261 = vcmask 261120
        %v263 = vsel %vm261, %v244, 0
        %265 = vmatprep.subr.bf16.mxu0 0
        %266 = vmatpush1.bf16.msra.mxu0 %v257
        %267 = vmatprep.subr.bf16.mxu0 0
        %268 = vmatpush1.bf16.msra.mxu0 %v258
        %269 = vmatprep.subr.bf16.mxu0 0
        %270 = vmatpush1.bf16.msra.mxu0 0
        %271 = vmatprep.subr.bf16.mxu0 0
        %272 = vmatpush1.bf16.msra.mxu0 0
        %273 = vmatprep.subr.bf16.mxu0 0
        %274 = vmatpush1.bf16.msra.mxu0 0
        %275 = vmatprep.subr.bf16.mxu0 0
        %276 = vmatpush1.bf16.msra.mxu0 0
        %277 = vmatprep.subr.bf16.mxu0 0
        %278 = vmatpush1.bf16.msra.mxu0 0
        %279 = vmatprep.subr.bf16.mxu0 0
        %280 = vmatpush1.bf16.msra.mxu0 0
        %281 = vmatprep.subr.bf16.mxu0 0
        %282 = vmatpush1.bf16.msra.mxu0 0
        %283 = vmatprep.subr.bf16.mxu0 0
        %284 = vmatpush1.bf16.msra.mxu0 0
        %285 = vmatprep.subr.bf16.mxu0 0
        %286 = vmatpush1.bf16.msra.mxu0 0
        %287 = vmatprep.subr.bf16.mxu0 0
        %288 = vmatpush1.bf16.msra.mxu0 0
        %289 = vmatprep.subr.bf16.mxu0 0
        %290 = vmatpush1.bf16.msra.mxu0 0
        %291 = vmatprep.subr.bf16.mxu0 0
        %292 = vmatpush1.bf16.msra.mxu0 0
        %293 = vmatprep.subr.bf16.mxu0 0
        %294 = vmatpush1.bf16.msra.mxu0 0
        %295 = vmatprep.subr.bf16.mxu0 0
        %296 = vmatpush1.bf16.msra.mxu0 0
        %297 = vmatprep.mubr.bf16.mxu0 0
        %298 = vmatmul.mubr.bf16.gmra.mrb[0].mxu0 %v263
        %v299 = vpop.f32.mrb[0].mxu0
        %v300 = vadd.f32 0.0, %v299
        %v301 = vpop.f32.mrb[0].mxu0
        %v302 = vpop.f32.mrb[0].mxu0
        %v303 = vpop.f32.mrb[0].mxu0
        %304 = vdwg.mxu0
        %v305 = vmul.f32 %v300, 0.17677669
        %307 = vrot.lane.b32.xlu0 %v305, 120
        %v308 = vpop.permute.xlu0 %307
        %310 = vrot.lane.b32.xlu0 %v305, 112
        %v311 = vpop.permute.xlu0 %310
        %313 = vrot.lane.b32.xlu0 %v305, 104
        %v314 = vpop.permute.xlu0 %313
        %v316 = vpack.c.bf16 %v305, %v305
        %v317 = vpack.c.bf16 %v308, %v308
        %v318 = vpack.c.bf16 %v311, %v311
        %v319 = vpack.c.bf16 %v314, %v314
        %321 = vrot.lane.b32.xlu0 %v300, 120
        %v322 = vpop.permute.xlu0 %321
        %324 = vrot.lane.b32.xlu0 %v300, 112
        %v325 = vpop.permute.xlu0 %324
        %327 = vrot.lane.b32.xlu0 %v300, 104
        %v328 = vpop.permute.xlu0 %327
        %v330 = vpack.c.bf16 %v300, %v300
        %v331 = vpack.c.bf16 %v322, %v322
        %v332 = vpack.c.bf16 %v325, %v325
        %v333 = vpack.c.bf16 %v328, %v328
        %335 = vrot.lane.b32.xlu0 %v330, 96
        %v336 = vpop.permute.xlu0 %335
        %vm337 = vcmask 64512
        %v339 = vsel %vm337, %v316, 0
        %v342 = vsel %vm337, %v336, 0
        %344 = vmatprep.subr.bf16.mxu0 0
        %345 = vmatpush1.bf16.xpose.msra.mxu0 %v342
        %346 = vmatprep.subr.bf16.mxu0 0
        %347 = vmatpush1.bf16.xpose.msra.mxu0 0
        %348 = vmatprep.subr.bf16.mxu0 0
        %349 = vmatpush1.bf16.xpose.msra.mxu0 0
        %350 = vmatprep.subr.bf16.mxu0 0
        %351 = vmatpush1.bf16.xpose.msra.mxu0 0
        %352 = vmatprep.subr.bf16.mxu0 0
        %353 = vmatpush1.bf16.xpose.msra.mxu0 0
        %354 = vmatprep.subr.bf16.mxu0 0
        %355 = vmatpush1.bf16.xpose.msra.mxu0 0
        %356 = vmatprep.subr.bf16.mxu0 0
        %357 = vmatpush1.bf16.xpose.msra.mxu0 0
        %358 = vmatprep.subr.bf16.mxu0 0
        %359 = vmatpush1.bf16.xpose.msra.mxu0 0
        %360 = vmatprep.subr.bf16.mxu0 0
        %361 = vmatpush1.bf16.xpose.msra.mxu0 0
        %362 = vmatprep.subr.bf16.mxu0 0
        %363 = vmatpush1.bf16.xpose.msra.mxu0 0
        %364 = vmatprep.subr.bf16.mxu0 0
        %365 = vmatpush1.bf16.xpose.msra.mxu0 0
        %366 = vmatprep.subr.bf16.mxu0 0
        %367 = vmatpush1.bf16.xpose.msra.mxu0 0
        %368 = vmatprep.subr.bf16.mxu0 0
        %369 = vmatpush1.bf16.xpose.msra.mxu0 0
        %370 = vmatprep.subr.bf16.mxu0 0
        %371 = vmatpush1.bf16.xpose.msra.mxu0 0
        %372 = vmatprep.subr.bf16.mxu0 0
        %373 = vmatpush1.bf16.xpose.msra.mxu0 0
        %374 = vmatprep.subr.bf16.mxu0 0
        %375 = vmatpush1.bf16.xpose.msra.mxu0 0
        %376 = vmatprep.mubr.bf16.mxu0 0
        %377 = vmatmul.mubr.bf16.gmra.mrb[0].mxu0 %v339
        %v378 = vpop.f32.mrb[0].mxu0
        %v379 = vadd.f32 0.0, %v378
        %v380 = vpop.f32.mrb[0].mxu0
        %v381 = vpop.f32.mrb[0].mxu0
        %v382 = vpop.f32.mrb[0].mxu0
        %383 = vdwg.mxu0
        %385 = vrot.lane.b32.xlu0 %v331, 96
        %v386 = vpop.permute.xlu0 %385
        %v388 = vsel %vm337, %v317, 0
        %v391 = vsel %vm337, %v386, 0
        %393 = vmatprep.subr.bf16.mxu0 0
        %394 = vmatpush1.bf16.xpose.msra.mxu0 %v391
        %395 = vmatprep.subr.bf16.mxu0 0
        %396 = vmatpush1.bf16.xpose.msra.mxu0 0
        %397 = vmatprep.subr.bf16.mxu0 0
        %398 = vmatpush1.bf16.xpose.msra.mxu0 0
        %399 = vmatprep.subr.bf16.mxu0 0
        %400 = vmatpush1.bf16.xpose.msra.mxu0 0
        %401 = vmatprep.subr.bf16.mxu0 0
        %402 = vmatpush1.bf16.xpose.msra.mxu0 0
        %403 = vmatprep.subr.bf16.mxu0 0
        %404 = vmatpush1.bf16.xpose.msra.mxu0 0
        %405 = vmatprep.subr.bf16.mxu0 0
        %406 = vmatpush1.bf16.xpose.msra.mxu0 0
        %407 = vmatprep.subr.bf16.mxu0 0
        %408 = vmatpush1.bf16.xpose.msra.mxu0 0
        %409 = vmatprep.subr.bf16.mxu0 0
        %410 = vmatpush1.bf16.xpose.msra.mxu0 0
        %411 = vmatprep.subr.bf16.mxu0 0
        %412 = vmatpush1.bf16.xpose.msra.mxu0 0
        %413 = vmatprep.subr.bf16.mxu0 0
        %414 = vmatpush1.bf16.xpose.msra.mxu0 0
        %415 = vmatprep.subr.bf16.mxu0 0
        %416 = vmatpush1.bf16.xpose.msra.mxu0 0
        %417 = vmatprep.subr.bf16.mxu0 0
        %418 = vmatpush1.bf16.xpose.msra.mxu0 0
        %419 = vmatprep.subr.bf16.mxu0 0
        %420 = vmatpush1.bf16.xpose.msra.mxu0 0
        %421 = vmatprep.subr.bf16.mxu0 0
        %422 = vmatpush1.bf16.xpose.msra.mxu0 0
        %423 = vmatprep.subr.bf16.mxu0 0
        %424 = vmatpush1.bf16.xpose.msra.mxu0 0
        %425 = vmatprep.mubr.bf16.mxu0 0
        %426 = vmatmul.mubr.bf16.gmra.mrb[0].mxu0 %v388
        %v427 = vpop.f32.mrb[0].mxu0
        %v428 = vadd.f32 0.0, %v427
        %v429 = vpop.f32.mrb[0].mxu0
        %v430 = vpop.f32.mrb[0].mxu0
        %v431 = vpop.f32.mrb[0].mxu0
        %432 = vdwg.mxu0
        %434 = vrot.lane.b32.xlu0 %v332, 96
        %v435 = vpop.permute.xlu0 %434
        %v437 = vsel %vm337, %v318, 0
        %v440 = vsel %vm337, %v435, 0
        %442 = vmatprep.subr.bf16.mxu0 0
        %443 = vmatpush1.bf16.xpose.msra.mxu0 %v440
        %444 = vmatprep.subr.bf16.mxu0 0
        %445 = vmatpush1.bf16.xpose.msra.mxu0 0
        %446 = vmatprep.subr.bf16.mxu0 0
        %447 = vmatpush1.bf16.xpose.msra.mxu0 0
        %448 = vmatprep.subr.bf16.mxu0 0
        %449 = vmatpush1.bf16.xpose.msra.mxu0 0
        %450 = vmatprep.subr.bf16.mxu0 0
        %451 = vmatpush1.bf16.xpose.msra.mxu0 0
        %452 = vmatprep.subr.bf16.mxu0 0
        %453 = vmatpush1.bf16.xpose.msra.mxu0 0
        %454 = vmatprep.subr.bf16.mxu0 0
        %455 = vmatpush1.bf16.xpose.msra.mxu0 0
        %456 = vmatprep.subr.bf16.mxu0 0
        %457 = vmatpush1.bf16.xpose.msra.mxu0 0
        %458 = vmatprep.subr.bf16.mxu0 0
        %459 = vmatpush1.bf16.xpose.msra.mxu0 0
        %460 = vmatprep.subr.bf16.mxu0 0
        %461 = vmatpush1.bf16.xpose.msra.mxu0 0
        %462 = vmatprep.subr.bf16.mxu0 0
        %463 = vmatpush1.bf16.xpose.msra.mxu0 0
        %464 = vmatprep.subr.bf16.mxu0 0
        %465 = vmatpush1.bf16.xpose.msra.mxu0 0
        %466 = vmatprep.subr.bf16.mxu0 0
        %467 = vmatpush1.bf16.xpose.msra.mxu0 0
        %468 = vmatprep.subr.bf16.mxu0 0
        %469 = vmatpush1.bf16.xpose.msra.mxu0 0
        %470 = vmatprep.subr.bf16.mxu0 0
        %471 = vmatpush1.bf16.xpose.msra.mxu0 0
        %472 = vmatprep.subr.bf16.mxu0 0
        %473 = vmatpush1.bf16.xpose.msra.mxu0 0
        %474 = vmatprep.mubr.bf16.mxu0 0
        %475 = vmatmul.mubr.bf16.gmra.mrb[0].mxu0 %v437
        %v476 = vpop.f32.mrb[0].mxu0
        %v477 = vadd.f32 0.0, %v476
        %v478 = vpop.f32.mrb[0].mxu0
        %v479 = vpop.f32.mrb[0].mxu0
        %v480 = vpop.f32.mrb[0].mxu0
        %481 = vdwg.mxu0
        %483 = vrot.lane.b32.xlu0 %v333, 96
        %v484 = vpop.permute.xlu0 %483
        %v486 = vsel %vm337, %v319, 0
        %v489 = vsel %vm337, %v484, 0
        %491 = vmatprep.subr.bf16.mxu0 0
        %492 = vmatpush1.bf16.xpose.msra.mxu0 %v489
        %493 = vmatprep.subr.bf16.mxu0 0
        %494 = vmatpush1.bf16.xpose.msra.mxu0 0
        %495 = vmatprep.subr.bf16.mxu0 0
        %496 = vmatpush1.bf16.xpose.msra.mxu0 0
        %497 = vmatprep.subr.bf16.mxu0 0
        %498 = vmatpush1.bf16.xpose.msra.mxu0 0
        %499 = vmatprep.subr.bf16.mxu0 0
        %500 = vmatpush1.bf16.xpose.msra.mxu0 0
        %501 = vmatprep.subr.bf16.mxu0 0
        %502 = vmatpush1.bf16.xpose.msra.mxu0 0
        %503 = vmatprep.subr.bf16.mxu0 0
        %504 = vmatpush1.bf16.xpose.msra.mxu0 0
        %505 = vmatprep.subr.bf16.mxu0 0
        %506 = vmatpush1.bf16.xpose.msra.mxu0 0
        %507 = vmatprep.subr.bf16.mxu0 0
        %508 = vmatpush1.bf16.xpose.msra.mxu0 0
        %509 = vmatprep.subr.bf16.mxu0 0
        %510 = vmatpush1.bf16.xpose.msra.mxu0 0
        %511 = vmatprep.subr.bf16.mxu0 0
        %512 = vmatpush1.bf16.xpose.msra.mxu0 0
        %513 = vmatprep.subr.bf16.mxu0 0
        %514 = vmatpush1.bf16.xpose.msra.mxu0 0
        %515 = vmatprep.subr.bf16.mxu0 0
        %516 = vmatpush1.bf16.xpose.msra.mxu0 0
        %517 = vmatprep.subr.bf16.mxu0 0
        %518 = vmatpush1.bf16.xpose.msra.mxu0 0
        %519 = vmatprep.subr.bf16.mxu0 0
        %520 = vmatpush1.bf16.xpose.msra.mxu0 0
        %521 = vmatprep.subr.bf16.mxu0 0
        %522 = vmatpush1.bf16.xpose.msra.mxu0 0
        %523 = vmatprep.mubr.bf16.mxu0 0
        %524 = vmatmul.mubr.bf16.gmra.mrb[0].mxu0 %v486
        %v525 = vpop.f32.mrb[0].mxu0
        %v526 = vadd.f32 0.0, %v525
        %v527 = vpop.f32.mrb[0].mxu0
        %v528 = vpop.f32.mrb[0].mxu0
        %v529 = vpop.f32.mrb[0].mxu0
        %530 = vdwg.mxu0
        %v531 = vlaneseq
        %v532 = vshrl.u32 %v531, 7
        %v533 = vlaneseq
        %v534 = vand.u32 %v533, 127
        %vm535 = vcmp.le.s32.totalorder %v534, %v532
        %v536 = vsel %vm535, 1, 0
        %vm537 = vcmp.eq.s32.totalorder %v536, 1
        %v538 = vsel %vm537, %v379, -1e+30
        %v539 = vsel %vm537, %v428, -1e+30
        %v540 = vsel %vm537, %v477, -1e+30
        %v541 = vsel %vm537, %v526, -1e+30
        %v542 = vsel %vm337, %v538, -inf
        %543 = vmax.xlane.f32.xlu0 %v542
        %v544 = vpop.xlane.xlu0 %543
        %v545 = vsel %vm337, %v539, -inf
        %546 = vmax.xlane.f32.xlu0 %v545
        %v547 = vpop.xlane.xlu0 %546
        %v548 = vsel %vm337, %v540, -inf
        %549 = vmax.xlane.f32.xlu0 %v548
        %v550 = vpop.xlane.xlu0 %549
        %v551 = vsel %vm337, %v541, -inf
        %552 = vmax.xlane.f32.xlu0 %v551
        %v553 = vpop.xlane.xlu0 %552
        %v554 = vsub.f32 %v538, %v544
        %v555 = vsub.f32 %v539, %v547
        %v556 = vsub.f32 %v540, %v550
        %v557 = vsub.f32 %v541, %v553
        %v558 = vmul.f32 %v554, 1.442695
        %v559 = vpow.pop %v558
        %v560 = vmul.f32 %v555, 1.442695
        %v561 = vpow.pop %v560
        %v562 = vmul.f32 %v556, 1.442695
        %v563 = vpow.pop %v562
        %v564 = vmul.f32 %v557, 1.442695
        %v565 = vpow.pop %v564
        %v566 = vsel %vm337, %v559, 0.0
        %567 = vadd.xlane.f32.xlu0 %v566
        %v568 = vpop.xlane.xlu0 %567
        %v569 = vsel %vm337, %v561, 0.0
        %570 = vadd.xlane.f32.xlu0 %v569
        %v571 = vpop.xlane.xlu0 %570
        %v572 = vsel %vm337, %v563, 0.0
        %573 = vadd.xlane.f32.xlu0 %v572
        %v574 = vpop.xlane.xlu0 %573
        %v575 = vsel %vm337, %v565, 0.0
        %576 = vadd.xlane.f32.xlu0 %v575
        %v577 = vpop.xlane.xlu0 %576
        %v578 = vrcp.pop %v568
        %v579 = vrcp.pop %v571
        %v580 = vrcp.pop %v574
        %v581 = vrcp.pop %v577
        %v582 = vmul.f32 %v559, %v578
        %v583 = vmul.f32 %v561, %v579
        %v584 = vmul.f32 %v563, %v580
        %v585 = vmul.f32 %v565, %v581
        %v586 = vpack.c.bf16 %v582, %v582
        %v587 = vpack.c.bf16 %v583, %v583
        %v588 = vpack.c.bf16 %v584, %v584
        %v589 = vpack.c.bf16 %v585, %v585
        %590 = vrot.lane.b32.xlu0 %v330, 64
        %v591 = vpop.permute.xlu0 %590
        %v593 = vsel %vm337, %v586, 0
        %vm595 = vcmask 1043456
        %v597 = vsel %vm595, %v591, 0
        %599 = vmatprep.subr.bf16.mxu0 0
        %600 = vmatpush1.bf16.msra.mxu0 %v597
        %601 = vmatprep.subr.bf16.mxu0 0
        %602 = vmatpush1.bf16.msra.mxu0 0
        %603 = vmatprep.subr.bf16.mxu0 0
        %604 = vmatpush1.bf16.msra.mxu0 0
        %605 = vmatprep.subr.bf16.mxu0 0
        %606 = vmatpush1.bf16.msra.mxu0 0
        %607 = vmatprep.subr.bf16.mxu0 0
        %608 = vmatpush1.bf16.msra.mxu0 0
        %609 = vmatprep.subr.bf16.mxu0 0
        %610 = vmatpush1.bf16.msra.mxu0 0
        %611 = vmatprep.subr.bf16.mxu0 0
        %612 = vmatpush1.bf16.msra.mxu0 0
        %613 = vmatprep.subr.bf16.mxu0 0
        %614 = vmatpush1.bf16.msra.mxu0 0
        %615 = vmatprep.subr.bf16.mxu0 0
        %616 = vmatpush1.bf16.msra.mxu0 0
        %617 = vmatprep.subr.bf16.mxu0 0
        %618 = vmatpush1.bf16.msra.mxu0 0
        %619 = vmatprep.subr.bf16.mxu0 0
        %620 = vmatpush1.bf16.msra.mxu0 0
        %621 = vmatprep.subr.bf16.mxu0 0
        %622 = vmatpush1.bf16.msra.mxu0 0
        %623 = vmatprep.subr.bf16.mxu0 0
        %624 = vmatpush1.bf16.msra.mxu0 0
        %625 = vmatprep.subr.bf16.mxu0 0
        %626 = vmatpush1.bf16.msra.mxu0 0
        %627 = vmatprep.subr.bf16.mxu0 0
        %628 = vmatpush1.bf16.msra.mxu0 0
        %629 = vmatprep.subr.bf16.mxu0 0
        %630 = vmatpush1.bf16.msra.mxu0 0
        %631 = vmatprep.mubr.bf16.mxu0 0
        %632 = vmatmul.mubr.bf16.gmra.mrb[0].mxu0 %v593
        %v633 = vpop.f32.mrb[0].mxu0
        %v634 = vadd.f32 0.0, %v633
        %v635 = vpop.f32.mrb[0].mxu0
        %v636 = vpop.f32.mrb[0].mxu0
        %v637 = vpop.f32.mrb[0].mxu0
        %638 = vdwg.mxu0
        %639 = vrot.lane.b32.xlu0 %v331, 64
        %v640 = vpop.permute.xlu0 %639
        %v642 = vsel %vm337, %v587, 0
        %v645 = vsel %vm595, %v640, 0
        %647 = vmatprep.subr.bf16.mxu0 0
        %648 = vmatpush1.bf16.msra.mxu0 %v645
        %649 = vmatprep.subr.bf16.mxu0 0
        %650 = vmatpush1.bf16.msra.mxu0 0
        %651 = vmatprep.subr.bf16.mxu0 0
        %652 = vmatpush1.bf16.msra.mxu0 0
        %653 = vmatprep.subr.bf16.mxu0 0
        %654 = vmatpush1.bf16.msra.mxu0 0
        %655 = vmatprep.subr.bf16.mxu0 0
        %656 = vmatpush1.bf16.msra.mxu0 0
        %657 = vmatprep.subr.bf16.mxu0 0
        %658 = vmatpush1.bf16.msra.mxu0 0
        %659 = vmatprep.subr.bf16.mxu0 0
        %660 = vmatpush1.bf16.msra.mxu0 0
        %661 = vmatprep.subr.bf16.mxu0 0
        %662 = vmatpush1.bf16.msra.mxu0 0
        %663 = vmatprep.subr.bf16.mxu0 0
        %664 = vmatpush1.bf16.msra.mxu0 0
        %665 = vmatprep.subr.bf16.mxu0 0
        %666 = vmatpush1.bf16.msra.mxu0 0
        %667 = vmatprep.subr.bf16.mxu0 0
        %668 = vmatpush1.bf16.msra.mxu0 0
        %669 = vmatprep.subr.bf16.mxu0 0
        %670 = vmatpush1.bf16.msra.mxu0 0
        %671 = vmatprep.subr.bf16.mxu0 0
        %672 = vmatpush1.bf16.msra.mxu0 0
        %673 = vmatprep.subr.bf16.mxu0 0
        %674 = vmatpush1.bf16.msra.mxu0 0
        %675 = vmatprep.subr.bf16.mxu0 0
        %676 = vmatpush1.bf16.msra.mxu0 0
        %677 = vmatprep.subr.bf16.mxu0 0
        %678 = vmatpush1.bf16.msra.mxu0 0
        %679 = vmatprep.mubr.bf16.mxu0 0
        %680 = vmatmul.mubr.bf16.gmra.mrb[0].mxu0 %v642
        %v681 = vpop.f32.mrb[0].mxu0
        %v682 = vadd.f32 0.0, %v681
        %v683 = vpop.f32.mrb[0].mxu0
        %v684 = vpop.f32.mrb[0].mxu0
        %v685 = vpop.f32.mrb[0].mxu0
        %686 = vdwg.mxu0
        %687 = vrot.lane.b32.xlu0 %v332, 64
        %v688 = vpop.permute.xlu0 %687
        %v690 = vsel %vm337, %v588, 0
        %v693 = vsel %vm595, %v688, 0
        %695 = vmatprep.subr.bf16.mxu0 0
        %696 = vmatpush1.bf16.msra.mxu0 %v693
        %697 = vmatprep.subr.bf16.mxu0 0
        %698 = vmatpush1.bf16.msra.mxu0 0
        %699 = vmatprep.subr.bf16.mxu0 0
        %700 = vmatpush1.bf16.msra.mxu0 0
        %701 = vmatprep.subr.bf16.mxu0 0
        %702 = vmatpush1.bf16.msra.mxu0 0
        %703 = vmatprep.subr.bf16.mxu0 0
        %704 = vmatpush1.bf16.msra.mxu0 0
        %705 = vmatprep.subr.bf16.mxu0 0
        %706 = vmatpush1.bf16.msra.mxu0 0
        %707 = vmatprep.subr.bf16.mxu0 0
        %708 = vmatpush1.bf16.msra.mxu0 0
        %709 = vmatprep.subr.bf16.mxu0 0
        %710 = vmatpush1.bf16.msra.mxu0 0
        %711 = vmatprep.subr.bf16.mxu0 0
        %712 = vmatpush1.bf16.msra.mxu0 0
        %713 = vmatprep.subr.bf16.mxu0 0
        %714 = vmatpush1.bf16.msra.mxu0 0
        %715 = vmatprep.subr.bf16.mxu0 0
        %716 = vmatpush1.bf16.msra.mxu0 0
        %717 = vmatprep.subr.bf16.mxu0 0
        %718 = vmatpush1.bf16.msra.mxu0 0
        %719 = vmatprep.subr.bf16.mxu0 0
        %720 = vmatpush1.bf16.msra.mxu0 0
        %721 = vmatprep.subr.bf16.mxu0 0
        %722 = vmatpush1.bf16.msra.mxu0 0
        %723 = vmatprep.subr.bf16.mxu0 0
        %724 = vmatpush1.bf16.msra.mxu0 0
        %725 = vmatprep.subr.bf16.mxu0 0
        %726 = vmatpush1.bf16.msra.mxu0 0
        %727 = vmatprep.mubr.bf16.mxu0 0
        %728 = vmatmul.mubr.bf16.gmra.mrb[0].mxu0 %v690
        %v729 = vpop.f32.mrb[0].mxu0
        %v730 = vadd.f32 0.0, %v729
        %v731 = vpop.f32.mrb[0].mxu0
        %v732 = vpop.f32.mrb[0].mxu0
        %v733 = vpop.f32.mrb[0].mxu0
        %734 = vdwg.mxu0
        %735 = vrot.lane.b32.xlu0 %v333, 64
        %v736 = vpop.permute.xlu0 %735
        %v738 = vsel %vm337, %v589, 0
        %v741 = vsel %vm595, %v736, 0
        %743 = vmatprep.subr.bf16.mxu0 0
        %744 = vmatpush1.bf16.msra.mxu0 %v741
        %745 = vmatprep.subr.bf16.mxu0 0
        %746 = vmatpush1.bf16.msra.mxu0 0
        %747 = vmatprep.subr.bf16.mxu0 0
        %748 = vmatpush1.bf16.msra.mxu0 0
        %749 = vmatprep.subr.bf16.mxu0 0
        %750 = vmatpush1.bf16.msra.mxu0 0
        %751 = vmatprep.subr.bf16.mxu0 0
        %752 = vmatpush1.bf16.msra.mxu0 0
        %753 = vmatprep.subr.bf16.mxu0 0
        %754 = vmatpush1.bf16.msra.mxu0 0
        %755 = vmatprep.subr.bf16.mxu0 0
        %756 = vmatpush1.bf16.msra.mxu0 0
        %757 = vmatprep.subr.bf16.mxu0 0
        %758 = vmatpush1.bf16.msra.mxu0 0
        %759 = vmatprep.subr.bf16.mxu0 0
        %760 = vmatpush1.bf16.msra.mxu0 0
        %761 = vmatprep.subr.bf16.mxu0 0
        %762 = vmatpush1.bf16.msra.mxu0 0
        %763 = vmatprep.subr.bf16.mxu0 0
        %764 = vmatpush1.bf16.msra.mxu0 0
        %765 = vmatprep.subr.bf16.mxu0 0
        %766 = vmatpush1.bf16.msra.mxu0 0
        %767 = vmatprep.subr.bf16.mxu0 0
        %768 = vmatpush1.bf16.msra.mxu0 0
        %769 = vmatprep.subr.bf16.mxu0 0
        %770 = vmatpush1.bf16.msra.mxu0 0
        %771 = vmatprep.subr.bf16.mxu0 0
        %772 = vmatpush1.bf16.msra.mxu0 0
        %773 = vmatprep.subr.bf16.mxu0 0
        %774 = vmatpush1.bf16.msra.mxu0 0
        %775 = vmatprep.mubr.bf16.mxu0 0
        %776 = vmatmul.mubr.bf16.gmra.mrb[0].mxu0 %v738
        %v777 = vpop.f32.mrb[0].mxu0
        %v778 = vadd.f32 0.0, %v777
        %v779 = vpop.f32.mrb[0].mxu0
        %v780 = vpop.f32.mrb[0].mxu0
        %v781 = vpop.f32.mrb[0].mxu0
        %782 = vdwg.mxu0
        %v783 = vpack.c.bf16 %v634, %v634
        %v784 = vld [vmem:[#allocation7] sm:$0xf]
        %v785 = vpack.c.bf16 %v682, %v682
        %s786 = scalar_lea.vmem [#allocation7], 4
        %v787 = vld [vmem:[%s786] sm:$0xf]
        %v789 = vsel %vm337, %v785, 0
        %v792 = vsel %vm595, %v787, 0
        %794 = vmatprep.subr.bf16.mxu0 0
        %795 = vmatpush1.bf16.msra.mxu0 %v792
        %796 = vmatprep.subr.bf16.mxu0 0
        %797 = vmatpush1.bf16.msra.mxu0 0
        %798 = vmatprep.subr.bf16.mxu0 0
        %799 = vmatpush1.bf16.msra.mxu0 0
        %800 = vmatprep.subr.bf16.mxu0 0
        %801 = vmatpush1.bf16.msra.mxu0 0
        %802 = vmatprep.subr.bf16.mxu0 0
        %803 = vmatpush1.bf16.msra.mxu0 0
        %804 = vmatprep.subr.bf16.mxu0 0
        %805 = vmatpush1.bf16.msra.mxu0 0
        %806 = vmatprep.subr.bf16.mxu0 0
        %807 = vmatpush1.bf16.msra.mxu0 0
        %808 = vmatprep.subr.bf16.mxu0 0
        %809 = vmatpush1.bf16.msra.mxu0 0
        %810 = vmatprep.subr.bf16.mxu0 0
        %811 = vmatpush1.bf16.msra.mxu0 0
        %812 = vmatprep.subr.bf16.mxu0 0
        %813 = vmatpush1.bf16.msra.mxu0 0
        %814 = vmatprep.subr.bf16.mxu0 0
        %815 = vmatpush1.bf16.msra.mxu0 0
        %816 = vmatprep.subr.bf16.mxu0 0
        %817 = vmatpush1.bf16.msra.mxu0 0
        %818 = vmatprep.subr.bf16.mxu0 0
        %819 = vmatpush1.bf16.msra.mxu0 0
        %820 = vmatprep.subr.bf16.mxu0 0
        %821 = vmatpush1.bf16.msra.mxu0 0
        %822 = vmatprep.subr.bf16.mxu0 0
        %823 = vmatpush1.bf16.msra.mxu0 0
        %824 = vmatprep.subr.bf16.mxu0 0
        %825 = vmatpush1.bf16.msra.mxu0 0
        %826 = vmatprep.mubr.bf16.mxu0 0
        %827 = vmatmul.mubr.bf16.gmra.mrb[0].mxu0 %v789
        %v828 = vpop.f32.mrb[0].mxu0
        %v829 = vadd.f32 0.0, %v828
        %v830 = vpop.f32.mrb[0].mxu0
        %v831 = vpop.f32.mrb[0].mxu0
        %v832 = vpop.f32.mrb[0].mxu0
        %833 = vdwg.mxu0
        %v835 = vsel %vm337, %v783, 0
        %v838 = vsel %vm595, %v784, 0
        %840 = vmatprep.subr.bf16.mxu0 0
        %841 = vmatpush1.bf16.msra.mxu0 %v838
        %842 = vmatprep.subr.bf16.mxu0 0
        %843 = vmatpush1.bf16.msra.mxu0 0
        %844 = vmatprep.subr.bf16.mxu0 0
        %845 = vmatpush1.bf16.msra.mxu0 0
        %846 = vmatprep.subr.bf16.mxu0 0
        %847 = vmatpush1.bf16.msra.mxu0 0
        %848 = vmatprep.subr.bf16.mxu0 0
        %849 = vmatpush1.bf16.msra.mxu0 0
        %850 = vmatprep.subr.bf16.mxu0 0
        %851 = vmatpush1.bf16.msra.mxu0 0
        %852 = vmatprep.subr.bf16.mxu0 0
        %853 = vmatpush1.bf16.msra.mxu0 0
        %854 = vmatprep.subr.bf16.mxu0 0
        %855 = vmatpush1.bf16.msra.mxu0 0
        %856 = vmatprep.subr.bf16.mxu0 0
        %857 = vmatpush1.bf16.msra.mxu0 0
        %858 = vmatprep.subr.bf16.mxu0 0
        %859 = vmatpush1.bf16.msra.mxu0 0
        %860 = vmatprep.subr.bf16.mxu0 0
        %861 = vmatpush1.bf16.msra.mxu0 0
        %862 = vmatprep.subr.bf16.mxu0 0
        %863 = vmatpush1.bf16.msra.mxu0 0
        %864 = vmatprep.subr.bf16.mxu0 0
        %865 = vmatpush1.bf16.msra.mxu0 0
        %866 = vmatprep.subr.bf16.mxu0 0
        %867 = vmatpush1.bf16.msra.mxu0 0
        %868 = vmatprep.subr.bf16.mxu0 0
        %869 = vmatpush1.bf16.msra.mxu0 0
        %870 = vmatprep.subr.bf16.mxu0 0
        %871 = vmatpush1.bf16.msra.mxu0 0
        %872 = vmatprep.mubr.bf16.mxu0 0
        %873 = vmatmul.mubr.bf16.gmra.mrb[0].mxu0 %v835
        %v874 = vpop.f32.mrb[0].mxu0
        %v875 = vadd.f32 %v829, %v874
        %v876 = vpop.f32.mrb[0].mxu0
        %v877 = vpop.f32.mrb[0].mxu0
        %v878 = vpop.f32.mrb[0].mxu0
        %879 = vdwg.mxu0
        %v880 = vpack.c.bf16 %v730, %v730
        %s881 = scalar_lea.vmem [#allocation7], 8
        %v882 = vld [vmem:[%s881] sm:$0xf]
        %v884 = vsel %vm337, %v880, 0
        %v887 = vsel %vm595, %v882, 0
        %889 = vmatprep.subr.bf16.mxu0 0
        %890 = vmatpush1.bf16.msra.mxu0 %v887
        %891 = vmatprep.subr.bf16.mxu0 0
        %892 = vmatpush1.bf16.msra.mxu0 0
        %893 = vmatprep.subr.bf16.mxu0 0
        %894 = vmatpush1.bf16.msra.mxu0 0
        %895 = vmatprep.subr.bf16.mxu0 0
        %896 = vmatpush1.bf16.msra.mxu0 0
        %897 = vmatprep.subr.bf16.mxu0 0
        %898 = vmatpush1.bf16.msra.mxu0 0
        %899 = vmatprep.subr.bf16.mxu0 0
        %900 = vmatpush1.bf16.msra.mxu0 0
        %901 = vmatprep.subr.bf16.mxu0 0
        %902 = vmatpush1.bf16.msra.mxu0 0
        %903 = vmatprep.subr.bf16.mxu0 0
        %904 = vmatpush1.bf16.msra.mxu0 0
        %905 = vmatprep.subr.bf16.mxu0 0
        %906 = vmatpush1.bf16.msra.mxu0 0
        %907 = vmatprep.subr.bf16.mxu0 0
        %908 = vmatpush1.bf16.msra.mxu0 0
        %909 = vmatprep.subr.bf16.mxu0 0
        %910 = vmatpush1.bf16.msra.mxu0 0
        %911 = vmatprep.subr.bf16.mxu0 0
        %912 = vmatpush1.bf16.msra.mxu0 0
        %913 = vmatprep.subr.bf16.mxu0 0
        %914 = vmatpush1.bf16.msra.mxu0 0
        %915 = vmatprep.subr.bf16.mxu0 0
        %916 = vmatpush1.bf16.msra.mxu0 0
        %917 = vmatprep.subr.bf16.mxu0 0
        %918 = vmatpush1.bf16.msra.mxu0 0
        %919 = vmatprep.subr.bf16.mxu0 0
        %920 = vmatpush1.bf16.msra.mxu0 0
        %921 = vmatprep.mubr.bf16.mxu0 0
        %922 = vmatmul.mubr.bf16.gmra.mrb[0].mxu0 %v884
        %v923 = vpop.f32.mrb[0].mxu0
        %v924 = vadd.f32 0.0, %v923
        %v925 = vpop.f32.mrb[0].mxu0
        %v926 = vpop.f32.mrb[0].mxu0
        %v927 = vpop.f32.mrb[0].mxu0
        %928 = vdwg.mxu0
        %v929 = vadd.f32 %v875, %v924
        %v930 = vpack.c.bf16 %v778, %v778
        %s931 = scalar_lea.vmem [#allocation7], 12
        %v932 = vld [vmem:[%s931] sm:$0xf]
        %v934 = vsel %vm337, %v930, 0
        %v937 = vsel %vm595, %v932, 0
        %939 = vmatprep.subr.bf16.mxu0 0
        %940 = vmatpush1.bf16.msra.mxu0 %v937
        %941 = vmatprep.subr.bf16.mxu0 0
        %942 = vmatpush1.bf16.msra.mxu0 0
        %943 = vmatprep.subr.bf16.mxu0 0
        %944 = vmatpush1.bf16.msra.mxu0 0
        %945 = vmatprep.subr.bf16.mxu0 0
        %946 = vmatpush1.bf16.msra.mxu0 0
        %947 = vmatprep.subr.bf16.mxu0 0
        %948 = vmatpush1.bf16.msra.mxu0 0
        %949 = vmatprep.subr.bf16.mxu0 0
        %950 = vmatpush1.bf16.msra.mxu0 0
        %951 = vmatprep.subr.bf16.mxu0 0
        %952 = vmatpush1.bf16.msra.mxu0 0
        %953 = vmatprep.subr.bf16.mxu0 0
        %954 = vmatpush1.bf16.msra.mxu0 0
        %955 = vmatprep.subr.bf16.mxu0 0
        %956 = vmatpush1.bf16.msra.mxu0 0
        %957 = vmatprep.subr.bf16.mxu0 0
        %958 = vmatpush1.bf16.msra.mxu0 0
        %959 = vmatprep.subr.bf16.mxu0 0
        %960 = vmatpush1.bf16.msra.mxu0 0
        %961 = vmatprep.subr.bf16.mxu0 0
        %962 = vmatpush1.bf16.msra.mxu0 0
        %963 = vmatprep.subr.bf16.mxu0 0
        %964 = vmatpush1.bf16.msra.mxu0 0
        %965 = vmatprep.subr.bf16.mxu0 0
        %966 = vmatpush1.bf16.msra.mxu0 0
        %967 = vmatprep.subr.bf16.mxu0 0
        %968 = vmatpush1.bf16.msra.mxu0 0
        %969 = vmatprep.subr.bf16.mxu0 0
        %970 = vmatpush1.bf16.msra.mxu0 0
        %971 = vmatprep.mubr.bf16.mxu0 0
        %972 = vmatmul.mubr.bf16.gmra.mrb[0].mxu0 %v934
        %v973 = vpop.f32.mrb[0].mxu0
        %v974 = vadd.f32 0.0, %v973
        %v975 = vpop.f32.mrb[0].mxu0
        %v976 = vpop.f32.mrb[0].mxu0
        %v977 = vpop.f32.mrb[0].mxu0
        %978 = vdwg.mxu0
        %v979 = vadd.f32 %v929, %v974
        %v980 = vld [vmem:[%s3] sm:$0x1]
        %v982 = vlaneseq
        %v983 = vshrl.u32 %v982, 7
        %v984 = vsub.s32 0, %v983
        %v985 = vrot.slane %v980, %v984
        %v987 = vadd.f32 %v979, %v985
        %988 = vst.msk [vmem:[%s241] sm:$0xff] %vm261, %v987
        %s989 = sand.u32 %s119, 1
        %s990 = scalar_lea.sflag [#allocation4], %s989
        %s991 = sand.u32 %s119, 1
        %s992 = smul.addr %s991, 8
        %s993 = scalar_lea.vmem [#allocation8], %s992
        // Predicated region
        $region49: #{tpu_custom_call.1} parent=35 // pred_check
          %p994 = pneg %p129
        $region50: #{tpu_custom_call.1} parent=35 // pred_check_branch
          %996 = sbr.rel (%p994) target = $region52
        $region51: #{tpu_custom_call.1} parent=35 // pred_region
          %s998 = ssub.s32 128, 128
          %999 = vsyncadd %s990, %s998
          %s1000 = smul.addr %s22, 128
          %s1001 = scalar_lea.hbm %s4, %s1000
          %s1003 = sshll.u32 %s993, 4
          %s1004 = int_to_ptr.vmem [resolvable:$true] %s1003
          %1006 = dma.vmem_to_hbm [thread:$0]  %s1004, 128, %s1001, %s990
        $region52: #{tpu_custom_call.1} parent=35 // pred_fallthru
          _
      $region36: #{tpu_custom_call.1} parent=5 // pred_fallthru
        _
      %p1007 = scmp.le.s32.totalorder 2, %s17
      // Predicated region
      $region53: #{tpu_custom_call.1} parent=5 // pred_check
        %p1008 = pneg %p1007
      $region54: #{tpu_custom_call.1} parent=5 // pred_check_branch
        %1010 = sbr.rel (%p1008) target = $region56
      $region55: #{tpu_custom_call.1} parent=5 // pred_region
        %s1011 = ssub.s32 %s17, 2
        // Predicated region
        $region57: #{tpu_custom_call.1} parent=55 // pred_check
          %p1012 = pneg %p135
        $region58: #{tpu_custom_call.1} parent=55 // pred_check_branch
          %1014 = sbr.rel (%p1012) target = $region60
        $region59: #{tpu_custom_call.1} parent=55 // pred_region
          %s1015 = sand.u32 %s120, 1
          %s1016 = scalar_lea.sflag [#allocation4], %s1015
          %s1017 = sand.u32 %s120, 1
          %s1018 = smul.addr %s1017, 8
          %s1019 = scalar_lea.vmem [#allocation8], %s1018
          %1020 = dma.done %s1016, 128
        $region60: #{tpu_custom_call.1} parent=55 // pred_fallthru
          _
      $region56: #{tpu_custom_call.1} parent=5 // pred_fallthru
        _
    $region6: #{tpu_custom_call.1} parent=1 // loop_footer
      %s21 = sadd.s32 1, %s17
    $region7: #{tpu_custom_call.1} parent=1 // loop_footer_branch
      %16 = sbr.rel target = $region3
    $region8: #{tpu_custom_call.1} parent=1 // loop_exit
      _
    %1021 = vsyncpa [#allocation3], 1
    %s1022 = scalar_lea.sflag [#allocation3], 1
    %1023 = vsyncpa %s1022, 1
    %1024 = vsyncpa [#allocation6], 1
    %1025 = vsyncpa [#allocation4], 1
    %s1026 = scalar_lea.sflag [#allocation4], 1
    %1027 = vsyncpa %s1026, 1

</llo_original>
